<compile_context>
chip_gen: v7x
topology: tpu7x:2x2x1
jax: 0.10.0
libtpu: 0.0.40
codegen_flags: <defaults>
</compile_context>

<pallas_src>
import functools

import jax
import jax.numpy as jnp
from jax import lax
from jax.experimental import pallas as pl
from jax.experimental.pallas import tpu as pltpu

_LANE = 128
_DEFAULT_BLOCK_ROWS = 8192   # 8192 x 128 x f32 = 4 MiB per input block
_CHUNK_ROWS = 64             # per-iteration slice: 64x128xf32 = 8 vregs/array


def _round_up(x: int, m: int) -> int:
    return ((x + m - 1) // m) * m


@functools.lru_cache(maxsize=None)
def _vmem_capacity_bytes() -> int:
    """Physical VMEM per core; conservative fallback if the query fails."""
    try:
        cap = int(pltpu.get_tpu_info().vmem_capacity_bytes)
        if cap > 0:
            return cap
    except Exception:
        pass
    return 64 << 20   # v7x per-TensorCore VMEM (smallest current generation)


@functools.lru_cache(maxsize=None)
def _num_tensorcores() -> int:
    """TensorCores per chip (2 on v7x, 1 on v5e/v6e)."""
    try:
        info = pltpu.get_tpu_info()
        for attr in ("num_tensorcores", "tensorcores_per_chip",
                     "num_tensor_cores"):
            v = getattr(info, attr, None)
            if isinstance(v, int) and v > 0:
                return max(1, min(2, int(v)))
    except Exception:
        pass
    try:
        kind = jax.devices()[0].device_kind.lower()
        if "v7" in kind:
            return 2
    except Exception:
        pass
    return 1


def _dice_bce_kernel(x_ref, t_ref, inter_ref, sxt_ref, bce_ref, *,
                     n_valid: int, block_rows: int, chunk_rows: int,
                     use_sigmoid: bool):
    c = pl.program_id(0)   # parallel split (megacore)
    i = pl.program_id(1)   # reduction axis over row-blocks of this split

    # Output blocks are the accumulators: resident in VMEM across the
    # "arbitrary" axis. Zero them on the first step of each split.
    @pl.when(i == 0)
    def _():
        inter_ref[...] = jnp.zeros_like(inter_ref)
        sxt_ref[...] = jnp.zeros_like(sxt_ref)
        bce_ref[...] = jnp.zeros_like(bce_ref)

    block_elems = block_rows * _LANE
    blk = c * pl.num_programs(1) + i          # nominal global block index
    start = blk * block_elems                 # nominal first element index
    n_chunks = block_rows // chunk_rows

    def run(masked: bool):
        def chunk(k, carry):
            acc_i, acc_s, acc_b = carry
            off = k * chunk_rows
            r0 = off if isinstance(off, int) else pl.multiple_of(off, chunk_rows)
            x = x_ref[pl.ds(r0, chunk_rows), :].astype(jnp.float32)
            t = t_ref[pl.ds(r0, chunk_rows), :].astype(jnp.float32)
            if masked:
                # Mask BEFORE any arithmetic so padded / clamped-window
                # garbage never reaches a log/exp.
                row = lax.broadcasted_iota(jnp.int32, (chunk_rows, _LANE), 0)
                lane = lax.broadcasted_iota(jnp.int32, (chunk_rows, _LANE), 1)
                elem = start + (r0 + row) * _LANE + lane
                m = elem < n_valid
                x = jnp.where(m, x, 0.0)
                t = jnp.where(m, t, 0.0)
            if use_sigmoid:
                # One softplus per element; everything derived from it.
                sp = jax.nn.softplus(-x)                 # = -log(sigmoid(x))
                log_p = jnp.maximum(-sp, -100.0)
                log_1mp = jnp.maximum(-x - sp, -100.0)   # softplus(x) = x + sp
                p = jnp.exp(-sp)                         # = sigmoid(x)
                if masked:
                    p = jnp.where(m, p, 0.0)
            else:
                # Inputs assumed to be probabilities in [0, 1] (same contract
                # as torch.binary_cross_entropy); clamp logs at -100.
                p = x
                log_p = jnp.maximum(jnp.log(p), -100.0)
                log_1mp = jnp.maximum(jnp.log1p(-p), -100.0)
            bce = -(t * (log_p - log_1mp) + log_1mp)
            if use_sigmoid and masked:
                bce = jnp.where(m, bce, 0.0)
            # (without sigmoid, masked positions give x=t=0 -> bce term is 0)

            # Reduce (chunk_rows, 128) -> (8, 128): pure VPU vreg adds.
            r = chunk_rows // 8
            acc_i = acc_i + (p * t).reshape(r, 8, _LANE).sum(axis=0)
            acc_s = acc_s + (p + t).reshape(r, 8, _LANE).sum(axis=0)
            acc_b = acc_b + bce.reshape(r, 8, _LANE).sum(axis=0)
            return acc_i, acc_s, acc_b

        zeros = jnp.zeros((8, _LANE), jnp.float32)
        init = (zeros, zeros, zeros)
        if n_chunks == 1:
            acc_i, acc_s, acc_b = chunk(0, init)
        else:
            unroll = True if n_chunks <= 8 else (4 if n_chunks % 4 == 0 else 1)
            acc_i, acc_s, acc_b = lax.fori_loop(0, n_chunks, chunk, init,
                                                unroll=unroll)
        inter_ref[...] += acc_i
        sxt_ref[...] += acc_s
        bce_ref[...] += acc_b

    block_full = start + block_elems <= n_valid
    block_any = start < n_valid

    # Fast path: block fully in range -> zero masking cost.
    @pl.when(block_full)
    def _():
        run(False)

    # Tail path: mask by true element index (ragged block edges and nominal
    # blocks past the end of the array).
    @pl.when(jnp.logical_and(block_any, jnp.logical_not(block_full)))
    def _():
        run(True)


def _partial_sums_jax(xv, tv, use_sigmoid: bool):
    """Pure-JAX partial sums for the (<128-element) remainder / tiny inputs."""
    xv = jnp.asarray(xv).astype(jnp.float32)
    tv = jnp.asarray(tv).astype(jnp.float32)
    if use_sigmoid:
        sp = jax.nn.softplus(-xv)
        p = jnp.exp(-sp)
        log_p = jnp.maximum(-sp, -100.0)
        log_1mp = jnp.maximum(-xv - sp, -100.0)
    else:
        p = xv
        log_p = jnp.maximum(jnp.log(p), -100.0)
        log_1mp = jnp.maximum(jnp.log1p(-p), -100.0)
    bce = -(tv * (log_p - log_1mp) + log_1mp)
    return jnp.sum(p * tv), jnp.sum(p + tv), jnp.sum(bce)


def dice_bce_loss(inputs, targets, *, use_sigmoid: bool = False,
                  smooth: float = 1.0):
    """Pallas implementation of DiceBCELoss.forward (returns a scalar f32)."""
    x = jnp.reshape(inputs, (-1,))      # native dtype; cast happens in-kernel
    t = jnp.reshape(targets, (-1,))
    n = int(x.shape[0])

    n_main = (n // _LANE) * _LANE       # lane-aligned prefix handled in-kernel
    rem = n - n_main

    if n_main == 0:
        # TODO(synk): inputs smaller than one 128-lane row skip the kernel and
        # are computed directly in the wrapper.
        inter, sxt, bce_sum = _partial_sums_jax(x, t, use_sigmoid)
    else:
        rows = n_main // _LANE
        x2 = x[:n_main].reshape(rows, _LANE)   # zero-copy for aligned inputs
        t2 = t[:n_main].reshape(rows, _LANE)

        in_bytes_per_row = _LANE * (x2.dtype.itemsize + t2.dtype.itemsize)
        cap = _vmem_capacity_bytes()
        # Keep the double-buffered input footprint under ~1/3 of physical VMEM.
        max_rows_vmem = max(8, (cap // 3) // (2 * in_bytes_per_row))
        block_rows = min(_DEFAULT_BLOCK_ROWS,
                         (max_rows_vmem // 8) * 8,
                         _round_up(rows, 8))
        block_rows = max(int(block_rows), 8)

        chunk_rows = 8
        for cand in (_CHUNK_ROWS, 32, 16, 8):
            if cand <= block_rows and block_rows % cand == 0:
                chunk_rows = cand
                break

        num_splits = _num_tensorcores()
        nb = pl.cdiv(rows, block_rows)          # total row-blocks
        bps = pl.cdiv(nb, num_splits)           # row-blocks per parallel split

        def in_map(c, i):
            # Clamp so the DMA window always targets an in-range block; nominal
            # blocks past the end are skipped inside the kernel via pl.when.
            return (jnp.minimum(c * bps + i, nb - 1), 0)

        kernel = functools.partial(
            _dice_bce_kernel, n_valid=n_main, block_rows=int(block_rows),
            chunk_rows=int(chunk_rows), use_sigmoid=bool(use_sigmoid))

        # Double-buffered input footprint + headroom; covers v5e's 16 MiB
        # scoped default and stays within v7x's 64 MiB physical VMEM.
        needed = 2 * block_rows * in_bytes_per_row
        vmem_limit = max(needed + (16 << 20), 32 << 20)
        vmem_limit = int(min(vmem_limit, cap - (8 << 20)))

        cost = pl.CostEstimate(
            flops=10 * n_main,
            transcendentals=(3 if use_sigmoid else 2) * n_main,
            bytes_accessed=n_main * (x2.dtype.itemsize + t2.dtype.itemsize)
            + 3 * num_splits * 8 * _LANE * 4)

        out_shapes = [jax.ShapeDtypeStruct((num_splits, 8, _LANE), jnp.float32)
                      for _ in range(3)]
        out_specs = [pl.BlockSpec((None, 8, _LANE), lambda c, i: (c, 0, 0))
                     for _ in range(3)]

        inter_p, sxt_p, bce_p = pl.pallas_call(
            kernel,
            out_shape=out_shapes,
            grid_spec=pltpu.PrefetchScalarGridSpec(
                num_scalar_prefetch=0,
                grid=(num_splits, bps),
                in_specs=[
                    pl.BlockSpec((block_rows, _LANE), in_map),
                    pl.BlockSpec((block_rows, _LANE), in_map),
                ],
                out_specs=out_specs,
            ),
            compiler_params=pltpu.CompilerParams(
                dimension_semantics=("parallel", "arbitrary"),
                vmem_limit_bytes=vmem_limit),
            cost_estimate=cost,
        )(x2, t2)

        # Tiny epilogue: one XLU reduce over num_splits*8*128 partials each.
        inter = jnp.sum(inter_p)
        sxt = jnp.sum(sxt_p)
        bce_sum = jnp.sum(bce_p)

        if rem:
            # Fold the <=127-element lane remainder in pure JAX (no jnp.pad,
            # no extra HBM round trip over the bulk of the data).
            ti, ts, tb = _partial_sums_jax(x[n_main:], t[n_main:], use_sigmoid)
            inter = inter + ti
            sxt = sxt + ts
            bce_sum = bce_sum + tb

    dice_loss = 1.0 - (2.0 * inter + smooth) / (sxt + smooth)
    bce_mean = bce_sum / float(n)
    return bce_mean + dice_loss


def _reference(inputs, targets, smooth: float = 1.0):
    x = jnp.reshape(inputs, (-1,)).astype(jnp.float32)
    t = jnp.reshape(targets, (-1,)).astype(jnp.float32)
    intersection = jnp.sum(x * t)
    dice = 1.0 - (2.0 * intersection + smooth) / (jnp.sum(x) + jnp.sum(t) + smooth)
    log_x = jnp.maximum(jnp.log(x), -100.0)
    log_1mx = jnp.maximum(jnp.log(1.0 - x), -100.0)
    bce = jnp.mean(-(t * log_x + (1.0 - t) * log_1mx))
    return bce + dice


if __name__ == "__main__":
    key = jax.random.PRNGKey(0)
    k1, k2, k3, k4, k5 = jax.random.split(key, 5)

    # NCHW inputs, as the PyTorch module would receive from a segmentation head.
    shape = (2, 4, 16, 16)
    targets = (jax.random.uniform(k2, shape) > 0.5).astype(jnp.float32)

    # Default path: use_sigmoid=False => inputs are already probabilities.
    probs = jax.nn.sigmoid(jax.random.normal(k1, shape, dtype=jnp.float32))
    loss = jax.block_until_ready(dice_bce_loss(probs, targets))
    ref = _reference(probs, targets)
    assert jnp.allclose(loss, ref, rtol=1e-5, atol=1e-5), (loss, ref)

    # Fused-sigmoid path: use_sigmoid=True => inputs are logits.
    logits = jax.random.normal(k3, shape, dtype=jnp.float32)
    loss_s = jax.block_until_ready(
        dice_bce_loss(logits, targets, use_sigmoid=True))
    ref_s = _reference(jax.nn.sigmoid(logits), targets)
    assert jnp.allclose(loss_s, ref_s, rtol=1e-5, atol=1e-5), (loss_s, ref_s)

    # Non-lane-aligned shape: exercises the no-pad prefix + wrapper-tail path.
    shape_odd = (2, 3, 14, 13)   # 1092 = 8*128 + 68 elements
    probs_o = jax.nn.sigmoid(jax.random.normal(k4, shape_odd, dtype=jnp.float32))
    targets_o = (jax.random.uniform(k5, shape_odd) > 0.5).astype(jnp.float32)
    loss_o = jax.block_until_ready(dice_bce_loss(probs_o, targets_o))
    ref_o = _reference(probs_o, targets_o)
    assert jnp.allclose(loss_o, ref_o, rtol=1e-5, atol=1e-5), (loss_o, ref_o)

    print("KERNEL_OK")
</pallas_src>

<mosaic_0001>
module attributes {stable_mosaic.version = 11 : i64} {
  func.func @_dice_bce_kernel(%arg0: i32, %arg1: i32, %arg2: memref<16x128xf32, #tpu.memory_space<vmem>>, %arg3: memref<16x128xf32, #tpu.memory_space<vmem>>, %arg4: memref<1x8x128xf32, #tpu.memory_space<vmem>>, %arg5: memref<1x8x128xf32, #tpu.memory_space<vmem>>, %arg6: memref<1x8x128xf32, #tpu.memory_space<vmem>>) attributes {dimension_semantics = [#tpu.dimension_semantics<parallel>, #tpu.dimension_semantics<arbitrary>], iteration_bounds = array<i64: 1, 1>, scalar_prefetch = 0 : i64, scratch_operands = 0 : i64, tpu.core_type = #tpu.core_type<tc>, window_params = [{transform_indices = @transform_0, window_bounds = array<i64: 16, 128>}, {transform_indices = @transform_1, window_bounds = array<i64: 16, 128>}, {transform_indices = @transform_2, window_bounds = array<i64: 1, 8, 128>}, {transform_indices = @transform_3, window_bounds = array<i64: 1, 8, 128>}, {transform_indices = @transform_4, window_bounds = array<i64: 1, 8, 128>}]} {
    %c0_i32 = arith.constant 0 : i32
    %0 = arith.cmpi eq, %arg1, %c0_i32 : i32
    %1 = arith.extui %0 : i1 to i32
    %c0_i32_0 = arith.constant 0 : i32
    %2 = arith.cmpi ne, %1, %c0_i32_0 : i32
    scf.if %2 {
      %cst = arith.constant 0.000000e+00 : f32
      %15 = vector.broadcast %cst : f32 to vector<8x128xf32>
      %c0 = arith.constant 0 : index
      %c0_6 = arith.constant 0 : index
      %c0_7 = arith.constant 0 : index
      %16 = vector.load %arg4[%c0, %c0_6, %c0_7] : memref<1x8x128xf32, #tpu.memory_space<vmem>>, vector<1x8x128xf32>
      %17 = vector.shape_cast %16 : vector<1x8x128xf32> to vector<8x128xf32>
      %18 = vector.shape_cast %15 : vector<8x128xf32> to vector<1x8x128xf32>
      tpu.vector_store %arg4[%c0, %c0_6, %c0_7], %18 {strides = array<i32>} : memref<1x8x128xf32, #tpu.memory_space<vmem>>, vector<1x8x128xf32>,
      %cst_8 = arith.constant 0.000000e+00 : f32
      %19 = vector.broadcast %cst_8 : f32 to vector<8x128xf32>
      %c0_9 = arith.constant 0 : index
      %c0_10 = arith.constant 0 : index
      %c0_11 = arith.constant 0 : index
      %20 = vector.load %arg5[%c0_9, %c0_10, %c0_11] : memref<1x8x128xf32, #tpu.memory_space<vmem>>, vector<1x8x128xf32>
      %21 = vector.shape_cast %20 : vector<1x8x128xf32> to vector<8x128xf32>
      %22 = vector.shape_cast %19 : vector<8x128xf32> to vector<1x8x128xf32>
      tpu.vector_store %arg5[%c0_9, %c0_10, %c0_11], %22 {strides = array<i32>} : memref<1x8x128xf32, #tpu.memory_space<vmem>>, vector<1x8x128xf32>,
      %cst_12 = arith.constant 0.000000e+00 : f32
      %23 = vector.broadcast %cst_12 : f32 to vector<8x128xf32>
      %c0_13 = arith.constant 0 : index
      %c0_14 = arith.constant 0 : index
      %c0_15 = arith.constant 0 : index
      %24 = vector.load %arg6[%c0_13, %c0_14, %c0_15] : memref<1x8x128xf32, #tpu.memory_space<vmem>>, vector<1x8x128xf32>
      %25 = vector.shape_cast %24 : vector<1x8x128xf32> to vector<8x128xf32>
      %26 = vector.shape_cast %23 : vector<8x128xf32> to vector<1x8x128xf32>
      tpu.vector_store %arg6[%c0_13, %c0_14, %c0_15], %26 {strides = array<i32>} : memref<1x8x128xf32, #tpu.memory_space<vmem>>, vector<1x8x128xf32>,
    } else {
    }
    %c1_i32 = arith.constant 1 : i32
    %3 = arith.muli %arg0, %c1_i32 : i32
    %4 = arith.addi %3, %arg1 : i32
    %c2048_i32 = arith.constant 2048 : i32
    %5 = arith.muli %4, %c2048_i32 : i32
    %c2048_i32_1 = arith.constant 2048 : i32
    %6 = arith.addi %5, %c2048_i32_1 : i32
    %c2048_i32_2 = arith.constant 2048 : i32
    %7 = arith.cmpi sle, %6, %c2048_i32_2 : i32
    %c2048_i32_3 = arith.constant 2048 : i32
    %8 = arith.cmpi slt, %5, %c2048_i32_3 : i32
    %9 = arith.extui %7 : i1 to i32
    %c0_i32_4 = arith.constant 0 : i32
    %10 = arith.cmpi ne, %9, %c0_i32_4 : i32
    scf.if %10 {
      %cst = arith.constant 0.000000e+00 : f32
      %15 = vector.broadcast %cst : f32 to vector<8x128xf32>
      %c0 = arith.constant 0 : index
      %c0_6 = arith.constant 0 : index
      %16 = vector.load %arg2[%c0, %c0_6] : memref<16x128xf32, #tpu.memory_space<vmem>>, vector<16x128xf32>
      %c0_7 = arith.constant 0 : index
      %c0_8 = arith.constant 0 : index
      %17 = vector.load %arg3[%c0_7, %c0_8] : memref<16x128xf32, #tpu.memory_space<vmem>>, vector<16x128xf32>
      %18 = math.log %16 : vector<16x128xf32>
      %cst_9 = arith.constant -1.000000e+02 : f32
      %19 = vector.broadcast %cst_9 : f32 to vector<16x128xf32>
      %20 = arith.maximumf %18, %19 : vector<16x128xf32>
      %cst_10 = arith.constant 0.000000e+00 : f32
      %21 = vector.broadcast %cst_10 : f32 to vector<16x128xf32>
      %22 = arith.subf %21, %16 : vector<16x128xf32>
      %23 = math.log1p %22 : vector<16x128xf32>
      %cst_11 = arith.constant -1.000000e+02 : f32
      %24 = vector.broadcast %cst_11 : f32 to vector<16x128xf32>
      %25 = arith.maximumf %23, %24 : vector<16x128xf32>
      %26 = arith.subf %20, %25 : vector<16x128xf32>
      %27 = arith.mulf %17, %26 : vector<16x128xf32>
      %28 = arith.addf %27, %25 : vector<16x128xf32>
      %cst_12 = arith.constant 0.000000e+00 : f32
      %29 = vector.broadcast %cst_12 : f32 to vector<16x128xf32>
      %30 = arith.subf %29, %28 : vector<16x128xf32>
      %31 = arith.mulf %16, %17 : vector<16x128xf32>
      %32 = vector.shape_cast %31 : vector<16x128xf32> to vector<2x8x128xf32>
      %cst_13 = arith.constant dense<0.000000e+00> : vector<8x128xf32>
      %33 = vector.multi_reduction <add>, %32, %cst_13 [0] : vector<2x8x128xf32> to vector<8x128xf32>
      %34 = arith.addf %15, %33 : vector<8x128xf32>
      %35 = arith.addf %16, %17 : vector<16x128xf32>
      %36 = vector.shape_cast %35 : vector<16x128xf32> to vector<2x8x128xf32>
      %cst_14 = arith.constant dense<0.000000e+00> : vector<8x128xf32>
      %37 = vector.multi_reduction <add>, %36, %cst_14 [0] : vector<2x8x128xf32> to vector<8x128xf32>
      %38 = arith.addf %15, %37 : vector<8x128xf32>
      %39 = vector.shape_cast %30 : vector<16x128xf32> to vector<2x8x128xf32>
      %cst_15 = arith.constant dense<0.000000e+00> : vector<8x128xf32>
      %40 = vector.multi_reduction <add>, %39, %cst_15 [0] : vector<2x8x128xf32> to vector<8x128xf32>
      %41 = arith.addf %15, %40 : vector<8x128xf32>
      %c0_16 = arith.constant 0 : index
      %c0_17 = arith.constant 0 : index
      %c0_18 = arith.constant 0 : index
      %42 = vector.load %arg4[%c0_16, %c0_17, %c0_18] : memref<1x8x128xf32, #tpu.memory_space<vmem>>, vector<1x8x128xf32>
      %43 = vector.shape_cast %42 : vector<1x8x128xf32> to vector<8x128xf32>
      %44 = arith.addf %43, %34 : vector<8x128xf32>
      %c0_19 = arith.constant 0 : index
      %c0_20 = arith.constant 0 : index
      %c0_21 = arith.constant 0 : index
      %45 = vector.load %arg4[%c0_19, %c0_20, %c0_21] : memref<1x8x128xf32, #tpu.memory_space<vmem>>, vector<1x8x128xf32>
      %46 = vector.shape_cast %45 : vector<1x8x128xf32> to vector<8x128xf32>
      %47 = vector.shape_cast %44 : vector<8x128xf32> to vector<1x8x128xf32>
      tpu.vector_store %arg4[%c0_19, %c0_20, %c0_21], %47 {strides = array<i32>} : memref<1x8x128xf32, #tpu.memory_space<vmem>>, vector<1x8x128xf32>,
      %c0_22 = arith.constant 0 : index
      %c0_23 = arith.constant 0 : index
      %c0_24 = arith.constant 0 : index
      %48 = vector.load %arg5[%c0_22, %c0_23, %c0_24] : memref<1x8x128xf32, #tpu.memory_space<vmem>>, vector<1x8x128xf32>
      %49 = vector.shape_cast %48 : vector<1x8x128xf32> to vector<8x128xf32>
      %50 = arith.addf %49, %38 : vector<8x128xf32>
      %c0_25 = arith.constant 0 : index
      %c0_26 = arith.constant 0 : index
      %c0_27 = arith.constant 0 : index
      %51 = vector.load %arg5[%c0_25, %c0_26, %c0_27] : memref<1x8x128xf32, #tpu.memory_space<vmem>>, vector<1x8x128xf32>
      %52 = vector.shape_cast %51 : vector<1x8x128xf32> to vector<8x128xf32>
      %53 = vector.shape_cast %50 : vector<8x128xf32> to vector<1x8x128xf32>
      tpu.vector_store %arg5[%c0_25, %c0_26, %c0_27], %53 {strides = array<i32>} : memref<1x8x128xf32, #tpu.memory_space<vmem>>, vector<1x8x128xf32>,
      %c0_28 = arith.constant 0 : index
      %c0_29 = arith.constant 0 : index
      %c0_30 = arith.constant 0 : index
      %54 = vector.load %arg6[%c0_28, %c0_29, %c0_30] : memref<1x8x128xf32, #tpu.memory_space<vmem>>, vector<1x8x128xf32>
      %55 = vector.shape_cast %54 : vector<1x8x128xf32> to vector<8x128xf32>
      %56 = arith.addf %55, %41 : vector<8x128xf32>
      %c0_31 = arith.constant 0 : index
      %c0_32 = arith.constant 0 : index
      %c0_33 = arith.constant 0 : index
      %57 = vector.load %arg6[%c0_31, %c0_32, %c0_33] : memref<1x8x128xf32, #tpu.memory_space<vmem>>, vector<1x8x128xf32>
      %58 = vector.shape_cast %57 : vector<1x8x128xf32> to vector<8x128xf32>
      %59 = vector.shape_cast %56 : vector<8x128xf32> to vector<1x8x128xf32>
      tpu.vector_store %arg6[%c0_31, %c0_32, %c0_33], %59 {strides = array<i32>} : memref<1x8x128xf32, #tpu.memory_space<vmem>>, vector<1x8x128xf32>,
    } else {
    }
    %true = arith.constant true
    %11 = arith.xori %7, %true : i1
    %12 = arith.andi %8, %11 : i1
    %13 = arith.extui %12 : i1 to i32
    %c0_i32_5 = arith.constant 0 : i32
    %14 = arith.cmpi ne, %13, %c0_i32_5 : i32
    scf.if %14 {
      %cst = arith.constant 0.000000e+00 : f32
      %15 = vector.broadcast %cst : f32 to vector<8x128xf32>
      %c0 = arith.constant 0 : index
      %c0_6 = arith.constant 0 : index
      %16 = vector.load %arg2[%c0, %c0_6] : memref<16x128xf32, #tpu.memory_space<vmem>>, vector<16x128xf32>
      %c0_7 = arith.constant 0 : index
      %c0_8 = arith.constant 0 : index
      %17 = vector.load %arg3[%c0_7, %c0_8] : memref<16x128xf32, #tpu.memory_space<vmem>>, vector<16x128xf32>
      %18 = tpu.iota {dimensions = array<i32: 0>} : vector<16x128xi32>
      %19 = tpu.iota {dimensions = array<i32: 1>} : vector<16x128xi32>
      %c0_i32_9 = arith.constant 0 : i32
      %20 = vector.broadcast %c0_i32_9 : i32 to vector<16x128xi32>
      %21 = arith.addi %20, %18 : vector<16x128xi32>
      %c128_i32 = arith.constant 128 : i32
      %22 = vector.broadcast %c128_i32 : i32 to vector<16x128xi32>
      %23 = arith.muli %21, %22 : vector<16x128xi32>
      %24 = vector.broadcast %5 : i32 to vector<16x128xi32>
      %25 = arith.addi %24, %23 : vector<16x128xi32>
      %26 = arith.addi %25, %19 : vector<16x128xi32>
      %c2048_i32_10 = arith.constant 2048 : i32
      %27 = vector.broadcast %c2048_i32_10 : i32 to vector<16x128xi32>
      %28 = arith.cmpi slt, %26, %27 : vector<16x128xi32>
      %cst_11 = arith.constant 0.000000e+00 : f32
      %29 = vector.broadcast %cst_11 : f32 to vector<16x128xf32>
      %30 = arith.select %28, %16, %29 : vector<16x128xi1>, vector<16x128xf32>
      %cst_12 = arith.constant 0.000000e+00 : f32
      %31 = vector.broadcast %cst_12 : f32 to vector<16x128xf32>
      %32 = arith.select %28, %17, %31 : vector<16x128xi1>, vector<16x128xf32>
      %33 = math.log %30 : vector<16x128xf32>
      %cst_13 = arith.constant -1.000000e+02 : f32
      %34 = vector.broadcast %cst_13 : f32 to vector<16x128xf32>
      %35 = arith.maximumf %33, %34 : vector<16x128xf32>
      %cst_14 = arith.constant 0.000000e+00 : f32
      %36 = vector.broadcast %cst_14 : f32 to vector<16x128xf32>
      %37 = arith.subf %36, %30 : vector<16x128xf32>
      %38 = math.log1p %37 : vector<16x128xf32>
      %cst_15 = arith.constant -1.000000e+02 : f32
      %39 = vector.broadcast %cst_15 : f32 to vector<16x128xf32>
      %40 = arith.maximumf %38, %39 : vector<16x128xf32>
      %41 = arith.subf %35, %40 : vector<16x128xf32>
      %42 = arith.mulf %32, %41 : vector<16x128xf32>
      %43 = arith.addf %42, %40 : vector<16x128xf32>
      %cst_16 = arith.constant 0.000000e+00 : f32
      %44 = vector.broadcast %cst_16 : f32 to vector<16x128xf32>
      %45 = arith.subf %44, %43 : vector<16x128xf32>
      %46 = arith.mulf %30, %32 : vector<16x128xf32>
      %47 = vector.shape_cast %46 : vector<16x128xf32> to vector<2x8x128xf32>
      %cst_17 = arith.constant dense<0.000000e+00> : vector<8x128xf32>
      %48 = vector.multi_reduction <add>, %47, %cst_17 [0] : vector<2x8x128xf32> to vector<8x128xf32>
      %49 = arith.addf %15, %48 : vector<8x128xf32>
      %50 = arith.addf %30, %32 : vector<16x128xf32>
      %51 = vector.shape_cast %50 : vector<16x128xf32> to vector<2x8x128xf32>
      %cst_18 = arith.constant dense<0.000000e+00> : vector<8x128xf32>
      %52 = vector.multi_reduction <add>, %51, %cst_18 [0] : vector<2x8x128xf32> to vector<8x128xf32>
      %53 = arith.addf %15, %52 : vector<8x128xf32>
      %54 = vector.shape_cast %45 : vector<16x128xf32> to vector<2x8x128xf32>
      %cst_19 = arith.constant dense<0.000000e+00> : vector<8x128xf32>
      %55 = vector.multi_reduction <add>, %54, %cst_19 [0] : vector<2x8x128xf32> to vector<8x128xf32>
      %56 = arith.addf %15, %55 : vector<8x128xf32>
      %c0_20 = arith.constant 0 : index
      %c0_21 = arith.constant 0 : index
      %c0_22 = arith.constant 0 : index
      %57 = vector.load %arg4[%c0_20, %c0_21, %c0_22] : memref<1x8x128xf32, #tpu.memory_space<vmem>>, vector<1x8x128xf32>
      %58 = vector.shape_cast %57 : vector<1x8x128xf32> to vector<8x128xf32>
      %59 = arith.addf %58, %49 : vector<8x128xf32>
      %c0_23 = arith.constant 0 : index
      %c0_24 = arith.constant 0 : index
      %c0_25 = arith.constant 0 : index
      %60 = vector.load %arg4[%c0_23, %c0_24, %c0_25] : memref<1x8x128xf32, #tpu.memory_space<vmem>>, vector<1x8x128xf32>
      %61 = vector.shape_cast %60 : vector<1x8x128xf32> to vector<8x128xf32>
      %62 = vector.shape_cast %59 : vector<8x128xf32> to vector<1x8x128xf32>
      tpu.vector_store %arg4[%c0_23, %c0_24, %c0_25], %62 {strides = array<i32>} : memref<1x8x128xf32, #tpu.memory_space<vmem>>, vector<1x8x128xf32>,
      %c0_26 = arith.constant 0 : index
      %c0_27 = arith.constant 0 : index
      %c0_28 = arith.constant 0 : index
      %63 = vector.load %arg5[%c0_26, %c0_27, %c0_28] : memref<1x8x128xf32, #tpu.memory_space<vmem>>, vector<1x8x128xf32>
      %64 = vector.shape_cast %63 : vector<1x8x128xf32> to vector<8x128xf32>
      %65 = arith.addf %64, %53 : vector<8x128xf32>
      %c0_29 = arith.constant 0 : index
      %c0_30 = arith.constant 0 : index
      %c0_31 = arith.constant 0 : index
      %66 = vector.load %arg5[%c0_29, %c0_30, %c0_31] : memref<1x8x128xf32, #tpu.memory_space<vmem>>, vector<1x8x128xf32>
      %67 = vector.shape_cast %66 : vector<1x8x128xf32> to vector<8x128xf32>
      %68 = vector.shape_cast %65 : vector<8x128xf32> to vector<1x8x128xf32>
      tpu.vector_store %arg5[%c0_29, %c0_30, %c0_31], %68 {strides = array<i32>} : memref<1x8x128xf32, #tpu.memory_space<vmem>>, vector<1x8x128xf32>,
      %c0_32 = arith.constant 0 : index
      %c0_33 = arith.constant 0 : index
      %c0_34 = arith.constant 0 : index
      %69 = vector.load %arg6[%c0_32, %c0_33, %c0_34] : memref<1x8x128xf32, #tpu.memory_space<vmem>>, vector<1x8x128xf32>
      %70 = vector.shape_cast %69 : vector<1x8x128xf32> to vector<8x128xf32>
      %71 = arith.addf %70, %56 : vector<8x128xf32>
      %c0_35 = arith.constant 0 : index
      %c0_36 = arith.constant 0 : index
      %c0_37 = arith.constant 0 : index
      %72 = vector.load %arg6[%c0_35, %c0_36, %c0_37] : memref<1x8x128xf32, #tpu.memory_space<vmem>>, vector<1x8x128xf32>
      %73 = vector.shape_cast %72 : vector<1x8x128xf32> to vector<8x128xf32>
      %74 = vector.shape_cast %71 : vector<8x128xf32> to vector<1x8x128xf32>
      tpu.vector_store %arg6[%c0_35, %c0_36, %c0_37], %74 {strides = array<i32>} : memref<1x8x128xf32, #tpu.memory_space<vmem>>, vector<1x8x128xf32>,
    } else {
    }
    return
  }
  func.func @transform_0(%arg0: i32, %arg1: i32) -> (i32, i32) {
    %c1_i32 = arith.constant 1 : i32
    %0 = arith.muli %arg0, %c1_i32 : i32
    %1 = arith.addi %0, %arg1 : i32
    %c0_i32 = arith.constant 0 : i32
    %2 = arith.minsi %1, %c0_i32 : i32
    %c0_i32_0 = arith.constant 0 : i32
    %c0_i32_1 = arith.constant 0 : i32
    return %2, %c0_i32_0 : i32, i32
  }
  func.func @transform_1(%arg0: i32, %arg1: i32) -> (i32, i32) {
    %c1_i32 = arith.constant 1 : i32
    %0 = arith.muli %arg0, %c1_i32 : i32
    %1 = arith.addi %0, %arg1 : i32
    %c0_i32 = arith.constant 0 : i32
    %2 = arith.minsi %1, %c0_i32 : i32
    %c0_i32_0 = arith.constant 0 : i32
    %c0_i32_1 = arith.constant 0 : i32
    return %2, %c0_i32_0 : i32, i32
  }
  func.func @transform_2(%arg0: i32, %arg1: i32) -> (i32, i32, i32) {
    %c0_i32 = arith.constant 0 : i32
    %c0_i32_0 = arith.constant 0 : i32
    %c0_i32_1 = arith.constant 0 : i32
    return %arg0, %c0_i32, %c0_i32_0 : i32, i32, i32
  }
  func.func @transform_3(%arg0: i32, %arg1: i32) -> (i32, i32, i32) {
    %c0_i32 = arith.constant 0 : i32
    %c0_i32_0 = arith.constant 0 : i32
    %c0_i32_1 = arith.constant 0 : i32
    return %arg0, %c0_i32, %c0_i32_0 : i32, i32, i32
  }
  func.func @transform_4(%arg0: i32, %arg1: i32) -> (i32, i32, i32) {
    %c0_i32 = arith.constant 0 : i32
    %c0_i32_0 = arith.constant 0 : i32
    %c0_i32_1 = arith.constant 0 : i32
    return %arg0, %c0_i32, %c0_i32_0 : i32, i32, i32
  }
}

</mosaic_0001>

<llo_original>
// kernel: tpu_custom_call.1
$region0: #{tpu_custom_call.1}
  #allocation0 [shape = 'u32[]', space=smem, size = 0x4, offset = 0x4, fixed_abs, tag = 'smem constant byte address 0x4 - core index']
  #allocation1 [shape = 'u32[144,128]{1,0:T(1,128)}', space=vmem, size = 0x12000, scoped, tag = 'internal scratch']
  %s0 = inlined_call_operand.hbm [shape: f32[16,128], index: 0, kind: input, shape index: {}]
  %s1 = inlined_call_operand.hbm [shape: f32[16,128], index: 1, kind: input, shape index: {}]
  %s2 = inlined_call_operand.hbm [shape: f32[1,8,128], index: 2, kind: output, shape index: {0}]
  %s3 = inlined_call_operand.hbm [shape: f32[1,8,128], index: 3, kind: output, shape index: {1}]
  %s4 = inlined_call_operand.hbm [shape: f32[1,8,128], index: 4, kind: output, shape index: {2}]
  %5 = xla_tuple %s2, %s3, %s4
  %s6 = sld [smem:[#allocation0]]
  $region54: #{tpu_custom_call.1} parent=0
    _
  %s8 = ssub.s32 1, %s6
  %s9 = scalar_select 0, %s8, %s6
  $region1: #{tpu_custom_call.1} parent=0
    #allocation2 [shape = 'u8[8192]{0}', space=vmem, size = 0x2000, scoped, tag = 'input window, operand 0, single buffered']
    #allocation3 [shape = 's32[1]{0}', space=sflag, size = 0x4, scoped, tag = 'scoped memory for tpu_custom_call.1']
    #allocation4 [shape = 's32[1]{0}', space=sflag, size = 0x4, scoped, tag = 'scoped memory for tpu_custom_call.1']
    #allocation5 [shape = 'u8[8192]{0}', space=vmem, size = 0x2000, scoped, tag = 'input window, operand 1, single buffered']
    #allocation6 [shape = 's32[1]{0}', space=sflag, size = 0x4, scoped, tag = 'scoped memory for tpu_custom_call.1']
    #allocation7 [shape = 'u8[4096]{0}', space=vmem, size = 0x1000, scoped, tag = 'output window, operand 0, single buffered']
    #allocation8 [shape = 'u8[4096]{0}', space=vmem, size = 0x1000, scoped, tag = 'output window, operand 1, single buffered']
    #allocation9 [shape = 's32[1]{0}', space=sflag, size = 0x4, scoped, tag = 'scoped memory for tpu_custom_call.1']
    #allocation10 [shape = 'u8[4096]{0}', space=vmem, size = 0x1000, scoped, tag = 'output window, operand 2, single buffered']
    %10 = vsyncpa [#allocation3], 0
    %11 = vsyncpa [#allocation6], 0
    %12 = vsyncpa [#allocation4], 0
    %13 = vsyncpa [#allocation9], 0
    // Predicated region
    $region2: #{tpu_custom_call.1} parent=1 // pred_check
      _
    $region3: #{tpu_custom_call.1} parent=1 // pred_check_branch
      %15 = sbr.rel (0) target = $region5
    $region4: #{tpu_custom_call.1} parent=1 // pred_region
      %s16 = sadd.s32 0, 0
      %p17 = scmp.lt.s32.totalorder %s16, 0
      %s18 = scalar_select %p17, %s16, 0
      %s19 = smul.u32 2, %s18
      %s21 = ssub.s32 256, 256
      %22 = vsyncadd [#allocation3], %s21
      %s23 = smul.addr %s19, 128
      %s24 = scalar_lea.hbm %s0, %s23
      %s25 = sshll.u32 [#allocation2], 4
      %s26 = int_to_ptr.vmem [resolvable:$true] %s25
      %31 = dma.hbm_to_vmem [thread:$0]  %s24, 256, %s26, [#allocation3], 128, 128, 8
    $region5: #{tpu_custom_call.1} parent=1 // pred_fallthru
      _
    // Predicated region
    $region6: #{tpu_custom_call.1} parent=1 // pred_check
      _
    $region7: #{tpu_custom_call.1} parent=1 // pred_check_branch
      %33 = sbr.rel (0) target = $region9
    $region8: #{tpu_custom_call.1} parent=1 // pred_region
      %s34 = sadd.s32 0, 0
      %p35 = scmp.lt.s32.totalorder %s34, 0
      %s36 = scalar_select %p35, %s34, 0
      %s37 = smul.u32 2, %s36
      %s39 = ssub.s32 256, 256
      %40 = vsyncadd [#allocation6], %s39
      %s41 = smul.addr %s37, 128
      %s42 = scalar_lea.hbm %s1, %s41
      %s43 = sshll.u32 [#allocation5], 4
      %s44 = int_to_ptr.vmem [resolvable:$true] %s43
      %49 = dma.hbm_to_vmem [thread:$0]  %s42, 256, %s44, [#allocation6], 128, 128, 8
    $region9: #{tpu_custom_call.1} parent=1 // pred_fallthru
      _
    // Predicated region
    $region10: #{tpu_custom_call.1} parent=1 // pred_check
      _
    $region11: #{tpu_custom_call.1} parent=1 // pred_check_branch
      %51 = sbr.rel (0) target = $region13
    $region12: #{tpu_custom_call.1} parent=1 // pred_region
      %52 = dma.done [#allocation3], 256
    $region13: #{tpu_custom_call.1} parent=1 // pred_fallthru
      _
    // Predicated region
    $region14: #{tpu_custom_call.1} parent=1 // pred_check
      _
    $region15: #{tpu_custom_call.1} parent=1 // pred_check_branch
      %54 = sbr.rel (0) target = $region17
    $region16: #{tpu_custom_call.1} parent=1 // pred_region
      %55 = dma.done [#allocation6], 256
    $region17: #{tpu_custom_call.1} parent=1 // pred_fallthru
      _
    %s56 = sadd.s32 0, 0
    %p57 = scmp.lt.s32.totalorder %s56, 0
    %s58 = scalar_select %p57, %s56, 0
    %s59 = smul.u32 2, %s58
    %s60 = sadd.s32 0, 0
    %p61 = scmp.lt.s32.totalorder %s60, 0
    %s62 = scalar_select %p61, %s60, 0
    %s63 = smul.u32 2, %s62
    %p64 = scmp.eq.s32.totalorder 0, 0
    // Predicated region
    $region18: #{tpu_custom_call.1} parent=1 // pred_check
      %p65 = pneg %p64
    $region19: #{tpu_custom_call.1} parent=1 // pred_check_branch
      %67 = sbr.rel (%p65) target = $region21
    $region20: #{tpu_custom_call.1} parent=1 // pred_region
      %68 = vst [vmem:[#allocation7] sm:$0xff] 0.0
      %69 = vst [vmem:[#allocation8] sm:$0xff] 0.0
      %70 = vst [vmem:[#allocation10] sm:$0xff] 0.0
    $region21: #{tpu_custom_call.1} parent=1 // pred_fallthru
      _
    %s71 = sadd.s32 0, 0
    %s72 = smul.u32 %s71, 2048
    %s73 = sadd.s32 %s72, 2048
    %p74 = scmp.le.s32.totalorder %s73, 2048
    %p75 = scmp.lt.s32.totalorder %s72, 2048
    // Predicated region
    $region22: #{tpu_custom_call.1} parent=1 // pred_check
      %p76 = pneg %p74
    $region23: #{tpu_custom_call.1} parent=1 // pred_check_branch
      %78 = sbr.rel (%p76) target = $region25
    $region24: #{tpu_custom_call.1} parent=1 // pred_region
      %v79 = vld [vmem:[#allocation2] sm:$0xff]
      %v80 = vld [vmem:[#allocation2 + $0x8] sm:$0xff]
      %v81 = vld [vmem:[#allocation5] sm:$0xff]
      %v82 = vld [vmem:[#allocation5 + $0x8] sm:$0xff]
      %v83 = vlog2.pop %v79
      %v84 = vmul.f32 %v83, 0.6931472
      %v85 = vlog2.pop %v80
      %v86 = vmul.f32 %v85, 0.6931472
      %v87 = vmax.f32 %v84, -100.0
      %v88 = vmax.f32 %v86, -100.0
      %v89 = vsub.f32 0.0, %v79
      %v90 = vsub.f32 0.0, %v80
      %v91 = vadd.f32 %v89, 1.0
      %v92 = vlog2.pop %v91
      %v93 = vmul.f32 %v92, 0.6931472
      %v94 = vmul.f32 -0.5, %v89
      %v95 = vadd.f32 %v94, 1.0
      %v96 = vmul.f32 %v95, %v89
      %v97 = vand.u32 2147483647, %v89
      %vm98 = vcmp.lt.f32.partialorder %v97, 0.0004427343
      %v99 = vsel %vm98, %v96, %v93
      %v100 = vadd.f32 %v90, 1.0
      %v101 = vlog2.pop %v100
      %v102 = vmul.f32 %v101, 0.6931472
      %v103 = vmul.f32 -0.5, %v90
      %v104 = vadd.f32 %v103, 1.0
      %v105 = vmul.f32 %v104, %v90
      %v106 = vand.u32 2147483647, %v90
      %vm107 = vcmp.lt.f32.partialorder %v106, 0.0004427343
      %v108 = vsel %vm107, %v105, %v102
      %v109 = vmax.f32 %v99, -100.0
      %v110 = vmax.f32 %v108, -100.0
      %v111 = vsub.f32 %v87, %v109
      %v112 = vsub.f32 %v88, %v110
      %v113 = vmul.f32 %v81, %v111
      %v114 = vmul.f32 %v82, %v112
      %v115 = vadd.f32 %v113, %v109
      %v116 = vadd.f32 %v114, %v110
      %v117 = vsub.f32 0.0, %v115
      %v118 = vsub.f32 0.0, %v116
      %v119 = vmul.f32 %v79, %v81
      %v120 = vmul.f32 %v80, %v82
      %v121 = vadd.f32 %v119, %v120
      %v122 = vadd.f32 %v121, 0.0
      %v123 = vadd.f32 %v79, %v81
      %v124 = vadd.f32 %v80, %v82
      %v125 = vadd.f32 %v123, %v124
      %v126 = vadd.f32 %v125, 0.0
      %v127 = vadd.f32 %v117, %v118
      %v128 = vadd.f32 %v127, 0.0
      %v129 = vld [vmem:[#allocation7] sm:$0xff]
      %v130 = vadd.f32 %v129, %v122
      %131 = vst [vmem:[#allocation7] sm:$0xff] %v130
      %v132 = vld [vmem:[#allocation8] sm:$0xff]
      %v133 = vadd.f32 %v132, %v126
      %134 = vst [vmem:[#allocation8] sm:$0xff] %v133
      %v135 = vld [vmem:[#allocation10] sm:$0xff]
      %v136 = vadd.f32 %v135, %v128
      %137 = vst [vmem:[#allocation10] sm:$0xff] %v136
    $region25: #{tpu_custom_call.1} parent=1 // pred_fallthru
      _
    %p138 = scmp.gt.s32.totalorder %s73, 2048
    %p139 = pnand %p75, %p138
    %p140 = pneg %p139
    // Predicated region
    $region26: #{tpu_custom_call.1} parent=1 // pred_check
      _
    $region27: #{tpu_custom_call.1} parent=1 // pred_check_branch
      %142 = sbr.rel (%p139) target = $region29
    $region28: #{tpu_custom_call.1} parent=1 // pred_region
      %v143 = vld [vmem:[#allocation2] sm:$0xff]
      %v144 = vld [vmem:[#allocation2 + $0x8] sm:$0xff]
      %v145 = vld [vmem:[#allocation5] sm:$0xff]
      %v146 = vld [vmem:[#allocation5 + $0x8] sm:$0xff]
      %v147 = vlaneseq
      %v148 = vshrl.u32 %v147, 7
      %v149 = vadd.s32 %v148, 8
      %v150 = vlaneseq
      %v151 = vand.u32 %v150, 127
      %v152 = vmul.u32 %v148, 128
      %v153 = vmul.u32 %v149, 128
      %v154 = vstv %s72
      %v155 = vadd.s32 %v154, %v152
      %v156 = vadd.s32 %v154, %v153
      %v157 = vadd.s32 %v155, %v151
      %v158 = vadd.s32 %v156, %v151
      %vm159 = vcmp.lt.s32.totalorder %v157, 2048
      %vm160 = vcmp.lt.s32.totalorder %v158, 2048
      %v161 = vsel %vm159, %v143, 0.0
      %v162 = vsel %vm160, %v144, 0.0
      %v163 = vsel %vm159, %v145, 0.0
      %v164 = vsel %vm160, %v146, 0.0
      %v165 = vlog2.pop %v161
      %v166 = vmul.f32 %v165, 0.6931472
      %v167 = vlog2.pop %v162
      %v168 = vmul.f32 %v167, 0.6931472
      %v169 = vmax.f32 %v166, -100.0
      %v170 = vmax.f32 %v168, -100.0
      %v171 = vsub.f32 0.0, %v161
      %v172 = vsub.f32 0.0, %v162
      %v173 = vadd.f32 %v171, 1.0
      %v174 = vlog2.pop %v173
      %v175 = vmul.f32 %v174, 0.6931472
      %v176 = vmul.f32 -0.5, %v171
      %v177 = vadd.f32 %v176, 1.0
      %v178 = vmul.f32 %v177, %v171
      %v179 = vand.u32 2147483647, %v171
      %vm180 = vcmp.lt.f32.partialorder %v179, 0.0004427343
      %v181 = vsel %vm180, %v178, %v175
      %v182 = vadd.f32 %v172, 1.0
      %v183 = vlog2.pop %v182
      %v184 = vmul.f32 %v183, 0.6931472
      %v185 = vmul.f32 -0.5, %v172
      %v186 = vadd.f32 %v185, 1.0
      %v187 = vmul.f32 %v186, %v172
      %v188 = vand.u32 2147483647, %v172
      %vm189 = vcmp.lt.f32.partialorder %v188, 0.0004427343
      %v190 = vsel %vm189, %v187, %v184
      %v191 = vmax.f32 %v181, -100.0
      %v192 = vmax.f32 %v190, -100.0
      %v193 = vsub.f32 %v169, %v191
      %v194 = vsub.f32 %v170, %v192
      %v195 = vmul.f32 %v163, %v193
      %v196 = vmul.f32 %v164, %v194
      %v197 = vadd.f32 %v195, %v191
      %v198 = vadd.f32 %v196, %v192
      %v199 = vsub.f32 0.0, %v197
      %v200 = vsub.f32 0.0, %v198
      %v201 = vmul.f32 %v161, %v163
      %v202 = vmul.f32 %v162, %v164
      %v203 = vadd.f32 %v201, %v202
      %v204 = vadd.f32 %v203, 0.0
      %v205 = vadd.f32 %v161, %v163
      %v206 = vadd.f32 %v162, %v164
      %v207 = vadd.f32 %v205, %v206
      %v208 = vadd.f32 %v207, 0.0
      %v209 = vadd.f32 %v199, %v200
      %v210 = vadd.f32 %v209, 0.0
      %v211 = vld [vmem:[#allocation7] sm:$0xff]
      %v212 = vadd.f32 %v211, %v204
      %213 = vst [vmem:[#allocation7] sm:$0xff] %v212
      %v214 = vld [vmem:[#allocation8] sm:$0xff]
      %v215 = vadd.f32 %v214, %v208
      %216 = vst [vmem:[#allocation8] sm:$0xff] %v215
      %v217 = vld [vmem:[#allocation10] sm:$0xff]
      %v218 = vadd.f32 %v217, %v210
      %219 = vst [vmem:[#allocation10] sm:$0xff] %v218
    $region29: #{tpu_custom_call.1} parent=1 // pred_fallthru
      _
    // Predicated region
    $region30: #{tpu_custom_call.1} parent=1 // pred_check
      _
    $region31: #{tpu_custom_call.1} parent=1 // pred_check_branch
      %221 = sbr.rel (0) target = $region33
    $region32: #{tpu_custom_call.1} parent=1 // pred_region
      %s223 = ssub.s32 128, 128
      %224 = vsyncadd [#allocation4], %s223
      %s226 = sshll.u32 [#allocation7], 4
      %s227 = int_to_ptr.vmem [resolvable:$true] %s226
      %229 = dma.vmem_to_hbm [thread:$0]  %s227, 128, %s2, [#allocation4]
    $region33: #{tpu_custom_call.1} parent=1 // pred_fallthru
      _
    // Predicated region
    $region34: #{tpu_custom_call.1} parent=1 // pred_check
      _
    $region35: #{tpu_custom_call.1} parent=1 // pred_check_branch
      %231 = sbr.rel (0) target = $region37
    $region36: #{tpu_custom_call.1} parent=1 // pred_region
      %s233 = ssub.s32 128, 128
      %234 = vsyncadd [#allocation9], %s233
      %s236 = sshll.u32 [#allocation8], 4
      %s237 = int_to_ptr.vmem [resolvable:$true] %s236
      %239 = dma.vmem_to_hbm [thread:$0]  %s237, 128, %s3, [#allocation9]
    $region37: #{tpu_custom_call.1} parent=1 // pred_fallthru
      _
    // Predicated region
    $region38: #{tpu_custom_call.1} parent=1 // pred_check
      _
    $region39: #{tpu_custom_call.1} parent=1 // pred_check_branch
      %241 = sbr.rel (0) target = $region41
    $region40: #{tpu_custom_call.1} parent=1 // pred_region
      %s243 = ssub.s32 128, 128
      %244 = vsyncadd [#allocation9], %s243
      %s246 = sshll.u32 [#allocation10], 4
      %s247 = int_to_ptr.vmem [resolvable:$true] %s246
      %249 = dma.vmem_to_hbm [thread:$0]  %s247, 128, %s4, [#allocation9]
    $region41: #{tpu_custom_call.1} parent=1 // pred_fallthru
      _
    // Predicated region
    $region42: #{tpu_custom_call.1} parent=1 // pred_check
      _
    $region43: #{tpu_custom_call.1} parent=1 // pred_check_branch
      %251 = sbr.rel (0) target = $region45
    $region44: #{tpu_custom_call.1} parent=1 // pred_region
      %252 = dma.done [#allocation4], 128
    $region45: #{tpu_custom_call.1} parent=1 // pred_fallthru
      _
    // Predicated region
    $region46: #{tpu_custom_call.1} parent=1 // pred_check
      _
    $region47: #{tpu_custom_call.1} parent=1 // pred_check_branch
      %254 = sbr.rel (0) target = $region49
    $region48: #{tpu_custom_call.1} parent=1 // pred_region
      %255 = dma.done [#allocation9], 128
    $region49: #{tpu_custom_call.1} parent=1 // pred_fallthru
      _
    // Predicated region
    $region50: #{tpu_custom_call.1} parent=1 // pred_check
      _
    $region51: #{tpu_custom_call.1} parent=1 // pred_check_branch
      %257 = sbr.rel (0) target = $region53
    $region52: #{tpu_custom_call.1} parent=1 // pred_region
      %258 = dma.done [#allocation9], 128
    $region53: #{tpu_custom_call.1} parent=1 // pred_fallthru
      _
    %259 = vsyncpa [#allocation3], 1
    %260 = vsyncpa [#allocation6], 1
    %261 = vsyncpa [#allocation4], 1
    %262 = vsyncpa [#allocation9], 1

</llo_original>
